<compile_context>
chip_gen: v7x
topology: tpu7x:2x2x1
jax: 0.10.0
libtpu: 0.0.40
codegen_flags: <defaults>
</compile_context>

<pallas_src>
import jax
import jax.numpy as jnp
from jax import lax
from jax.experimental import pallas as pl
from jax.experimental.pallas import tpu as pltpu

H = 128  # hidden size (small stand-in for SpanBERT's 1024)


# --------------------------------------------------------------------------
# In-kernel helpers
# --------------------------------------------------------------------------
def _row_inv_norm(x):
    # x: (S, H) -> (S, 1) inverse L2 norm per row (norm clamped at ~1e-8,
    # matching F.cosine_similarity's eps).  rsqrt runs on the EUP slot.
    nsq = jnp.sum(x * x, axis=-1, keepdims=True)
    return lax.rsqrt(jnp.maximum(nsq, 1e-16))


def _span_sum(x, inv_n, lo, hi):
    # Sum of L2-normalized rows i with lo <= i < hi of x (S, H) -> (1, H).
    # The mask and inverse norm fold into one per-row scalar weight, so no
    # normalized (S, H) copy is materialized.
    rows = lax.broadcasted_iota(jnp.int32, inv_n.shape, 0)
    w = jnp.where((rows >= lo) & (rows < hi), inv_n, 0.0)       # (S, 1)
    return jnp.sum(w * x, axis=0, keepdims=True)                # (1, H)


def _argmax_lane(row):
    # row: (1, S) f32 -> f32 index of the first maximal lane (scalar).
    s = row.shape[1]
    idx = lax.broadcasted_iota(jnp.int32, row.shape, 1).astype(jnp.float32)
    mx = jnp.max(row, axis=1, keepdims=True)
    cand = jnp.where(row >= mx, idx, float(s))
    return jnp.min(cand)


# --------------------------------------------------------------------------
# Fused scoring kernel
#   spans (SMEM, int32[6]): [text_start, text_end, question_start,
#                            question_end, answer_start, answer_end]
#   q (1,Sq,H), t (1,St,H), s (1,Ss,H)  +  QA head params -> score (SMEM f32[1])
# --------------------------------------------------------------------------
def _fused_score_kernel(spans_ref, q_ref, t_ref, s_ref,
                        wq_ref, bq_ref, wc_ref, bc_ref, wo_t_ref, bo_t_ref,
                        score_ref):
    q = q_ref[0]                                 # (Sq, H) f32
    t = t_ref[0]                                 # (St, H) f32
    s = s_ref[0]                                 # (Ss, H) f32
    sq = q.shape[0]
    ss = s.shape[0]

    t_lo = spans_ref[0]
    t_hi = spans_ref[1]
    q_lo = spans_ref[2]
    q_hi = spans_ref[3]
    a_lo = spans_ref[4].astype(jnp.float32)
    a_hi = spans_ref[5].astype(jnp.float32)

    # --- coreference & sentence cosine similarity (sum-of-rows identity) ---
    #   mean_ij(a_n_i . b_n_j) = (sum_i a_n_i) . (sum_j b_n_j) / (M*N)
    inv_q = _row_inv_norm(q)                     # (Sq, 1)
    inv_t = _row_inv_norm(t)                     # (St, 1)
    inv_s = _row_inv_norm(s)                     # (Ss, 1)

    t_span = _span_sum(t, inv_t, t_lo, t_hi)     # (1, H)
    q_span = _span_sum(q, inv_q, q_lo, q_hi)     # (1, H)
    m = (t_hi - t_lo).astype(jnp.float32)
    n = (q_hi - q_lo).astype(jnp.float32)
    coref_sim = jnp.sum(t_span * q_span) / (m * n)

    q_inner = _span_sum(q, inv_q, 1, sq - 1)     # drop [CLS]/[SEP]
    s_inner = _span_sum(s, inv_s, 1, ss - 1)
    sent_sim = jnp.sum(q_inner * s_inner) / float((sq - 2) * (ss - 2))

    # --- QA attention head (bf16 MXU operands, f32 accumulation) ------------
    q_b = q.astype(jnp.bfloat16)
    t_b = t.astype(jnp.bfloat16)
    q_att = jnp.dot(q_b, wq_ref[...], preferred_element_type=jnp.float32) + bq_ref[...]
    c_att = jnp.dot(t_b, wc_ref[...], preferred_element_type=jnp.float32) + bc_ref[...]
    scores = lax.dot_general(c_att.astype(jnp.bfloat16),
                             q_att.astype(jnp.bfloat16),
                             (((1,), (1,)), ((), ())),
                             preferred_element_type=jnp.float32)   # (St, Sq)
    scores = scores - jnp.max(scores, axis=-1, keepdims=True)
    p = jnp.exp(scores)
    # Exact reciprocal: attention feeds an argmax, approx recip can flip ties.
    attn = p * pl.reciprocal(jnp.sum(p, axis=-1, keepdims=True), approx=False)
    attended = jnp.dot(attn.astype(jnp.bfloat16), q_b,
                       preferred_element_type=jnp.float32)          # (St, H)
    combined = t + attended

    # Lane-dense logits: wo_t (2, H) . combined (St, H)^T -> (2, St)
    logits_t = lax.dot_general(wo_t_ref[...], combined.astype(jnp.bfloat16),
                               (((1,), (1,)), ((), ())),
                               preferred_element_type=jnp.float32) + bo_t_ref[...]

    # argmax + F1 computed in-kernel; indices are exact small integers in f32.
    start_idx = _argmax_lane(logits_t[0:1, :])
    end_idx = _argmax_lane(logits_t[1:2, :]) + 1.0

    pred_len = end_idx - start_idx
    true_len = a_hi - a_lo
    overlap = jnp.maximum(0.0, jnp.minimum(end_idx, a_hi) -
                          jnp.maximum(start_idx, a_lo))
    precision = overlap / jnp.maximum(pred_len, 1.0)
    recall = overlap / jnp.maximum(true_len, 1.0)
    denom = precision + recall
    f1 = jnp.where(denom > 0.0,
                   2.0 * precision * recall / jnp.maximum(denom, 1e-30),
                   0.0)
    f1 = jnp.where((pred_len <= 0.0) | (true_len <= 0.0), 0.0, f1)

    score_ref[0] = (coref_sim + 1.0) * 0.5 + f1 + (sent_sim + 1.0) * 0.5


# --------------------------------------------------------------------------
# Wrapper
# --------------------------------------------------------------------------
def prepare_params(params):
    """PyTorch-layout params -> kernel layout (bf16 matmul weights, wo transposed)."""
    return dict(
        wq=params["wq"].astype(jnp.bfloat16),            # (H, H)
        bq=params["bq"].astype(jnp.float32),              # (1, H)
        wc=params["wc"].astype(jnp.bfloat16),             # (H, H)
        bc=params["bc"].astype(jnp.float32),              # (1, H)
        wo_t=params["wo"].T.astype(jnp.bfloat16),         # (2, H)  lane-dense
        bo_t=params["bo"].T.astype(jnp.float32),          # (2, 1)
    )


def fused_score(spans, question_emb, text_emb, sent_emb, kparams):
    """spans: int32 (6,); question_emb (1,Sq,H); text_emb (1,St,H); sent_emb (1,Ss,H)."""
    _, sq, h = question_emb.shape
    _, st, _ = text_emb.shape
    _, ss, _ = sent_emb.shape

    operands = (spans, question_emb, text_emb, sent_emb,
                kparams["wq"], kparams["bq"], kparams["wc"], kparams["bc"],
                kparams["wo_t"], kparams["bo_t"])

    flops = (2 * sq * h * h + 2 * st * h * h          # q_att / c_att
             + 2 * st * sq * h + 2 * st * sq * h      # scores / attended
             + 2 * 2 * st * h)                        # logits
    transcendentals = st * sq + (sq + st + ss) + st   # exp + rsqrt + recip
    in_bytes = sum(int(x.nbytes) for x in operands)

    vmem_limit = int(min(64 * 1024 * 1024,
                         max(4 * 1024 * 1024, 6 * in_bytes)))

    out = pl.pallas_call(
        _fused_score_kernel,
        out_shape=jax.ShapeDtypeStruct((1,), jnp.float32),
        in_specs=[pl.BlockSpec(memory_space=pltpu.MemorySpace.SMEM)]
                 + [pl.BlockSpec(memory_space=pltpu.MemorySpace.VMEM)] * 9,
        out_specs=pl.BlockSpec(memory_space=pltpu.MemorySpace.SMEM),
        cost_estimate=pl.CostEstimate(flops=int(flops),
                                      transcendentals=int(transcendentals),
                                      bytes_accessed=int(in_bytes + 4)),
        compiler_params=pltpu.CompilerParams(vmem_limit_bytes=vmem_limit),
    )(*operands)
    return out[0]


def model_forward(kparams, sents_embedding_ls, true_sent_idx,
                  text_embeddings, question_embeddings,
                  text_start, text_end, question_start, question_end,
                  answer_start, answer_end):
    # true_sent_idx is a static Python int: only the true sentence contributes
    # to the returned score, so only that one is touched.  (1, S, H) arrays
    # are passed straight through; the leading dim is squeezed in the kernel.
    sent_emb = sents_embedding_ls[true_sent_idx]              # (1, Ss, H)
    spans = jnp.array([text_start, text_end, question_start, question_end,
                       answer_start, answer_end], dtype=jnp.int32)
    return fused_score(spans, question_embeddings, text_embeddings,
                       sent_emb, kparams)


if __name__ == "__main__":
    key = jax.random.PRNGKey(0)
    ks = jax.random.split(key, 12)

    St, Sq, Ss, n_sents = 16, 8, 8, 3

    # "last_hidden_state"-style inputs (stand-ins for SpanBERT outputs)
    text_embeddings = jax.random.normal(ks[0], (1, St, H), jnp.float32)
    question_embeddings = jax.random.normal(ks[1], (1, Sq, H), jnp.float32)
    sents_embedding_ls = [
        jax.random.normal(ks[2 + i], (1, Ss, H), jnp.float32) for i in range(n_sents)
    ]

    # Deterministic synthetic head parameters.
    # nn.Linear(h, h): y = x W^T + b ; weights stored pre-transposed -> (in, out)
    scale = 0.02
    params = dict(
        wq=jax.random.normal(ks[6], (H, H), jnp.float32) * scale,
        bq=jax.random.normal(ks[7], (1, H), jnp.float32) * scale,
        wc=jax.random.normal(ks[8], (H, H), jnp.float32) * scale,
        bc=jax.random.normal(ks[9], (1, H), jnp.float32) * scale,
        wo=jax.random.normal(ks[10], (H, 2), jnp.float32) * scale,
        bo=jax.random.normal(ks[11], (1, 2), jnp.float32) * scale,
    )
    kparams = prepare_params(params)   # one-time layout/dtype prep

    score = model_forward(
        kparams, sents_embedding_ls, true_sent_idx=1,
        text_embeddings=text_embeddings,
        question_embeddings=question_embeddings,
        text_start=2, text_end=10,
        question_start=1, question_end=7,
        answer_start=3, answer_end=6,
    )
    jax.block_until_ready(score)
    print("KERNEL_OK")
</pallas_src>

<mosaic_0001>
module attributes {stable_mosaic.version = 11 : i64} {
  func.func @_fused_score_kernel(%arg0: memref<6xi32, #tpu.memory_space<smem>>, %arg1: memref<1x8x128xf32, #tpu.memory_space<vmem>>, %arg2: memref<1x16x128xf32, #tpu.memory_space<vmem>>, %arg3: memref<1x8x128xf32, #tpu.memory_space<vmem>>, %arg4: memref<128x128xbf16, #tpu.memory_space<vmem>>, %arg5: memref<1x128xf32, #tpu.memory_space<vmem>>, %arg6: memref<128x128xbf16, #tpu.memory_space<vmem>>, %arg7: memref<1x128xf32, #tpu.memory_space<vmem>>, %arg8: memref<2x128xbf16, #tpu.memory_space<vmem>>, %arg9: memref<2x1xf32, #tpu.memory_space<vmem>>, %arg10: memref<1xf32, #tpu.memory_space<smem>>) attributes {dimension_semantics = [], scalar_prefetch = 0 : i64, scratch_operands = 0 : i64, tpu.core_type = #tpu.core_type<tc>} {
    %c0 = arith.constant 0 : index
    %c0_0 = arith.constant 0 : index
    %c0_1 = arith.constant 0 : index
    %0 = vector.load %arg1[%c0, %c0_0, %c0_1] : memref<1x8x128xf32, #tpu.memory_space<vmem>>, vector<1x8x128xf32>
    %1 = vector.shape_cast %0 : vector<1x8x128xf32> to vector<8x128xf32>
    %c0_2 = arith.constant 0 : index
    %c0_3 = arith.constant 0 : index
    %c0_4 = arith.constant 0 : index
    %2 = vector.load %arg2[%c0_2, %c0_3, %c0_4] : memref<1x16x128xf32, #tpu.memory_space<vmem>>, vector<1x16x128xf32>
    %3 = vector.shape_cast %2 : vector<1x16x128xf32> to vector<16x128xf32>
    %c0_5 = arith.constant 0 : index
    %c0_6 = arith.constant 0 : index
    %c0_7 = arith.constant 0 : index
    %4 = vector.load %arg3[%c0_5, %c0_6, %c0_7] : memref<1x8x128xf32, #tpu.memory_space<vmem>>, vector<1x8x128xf32>
    %5 = vector.shape_cast %4 : vector<1x8x128xf32> to vector<8x128xf32>
    %c0_8 = arith.constant 0 : index
    %6 = memref.load %arg0[%c0_8] : memref<6xi32, #tpu.memory_space<smem>>
    %c1 = arith.constant 1 : index
    %7 = memref.load %arg0[%c1] : memref<6xi32, #tpu.memory_space<smem>>
    %c2 = arith.constant 2 : index
    %8 = memref.load %arg0[%c2] : memref<6xi32, #tpu.memory_space<smem>>
    %c3 = arith.constant 3 : index
    %9 = memref.load %arg0[%c3] : memref<6xi32, #tpu.memory_space<smem>>
    %c4 = arith.constant 4 : index
    %10 = memref.load %arg0[%c4] : memref<6xi32, #tpu.memory_space<smem>>
    %11 = arith.sitofp %10 : i32 to f32
    %c5 = arith.constant 5 : index
    %12 = memref.load %arg0[%c5] : memref<6xi32, #tpu.memory_space<smem>>
    %13 = arith.sitofp %12 : i32 to f32
    %14 = arith.mulf %1, %1 : vector<8x128xf32>
    %cst = arith.constant dense<0.000000e+00> : vector<8xf32>
    %15 = vector.multi_reduction <add>, %14, %cst [1] : vector<8x128xf32> to vector<8xf32>
    %16 = vector.shape_cast %15 : vector<8xf32> to vector<8x1xf32>
    %cst_9 = arith.constant 1.000000e-16 : f32
    %17 = vector.broadcast %cst_9 : f32 to vector<8x1xf32>
    %18 = arith.maximumf %16, %17 : vector<8x1xf32>
    %19 = math.rsqrt %18 : vector<8x1xf32>
    %20 = arith.mulf %3, %3 : vector<16x128xf32>
    %cst_10 = arith.constant dense<0.000000e+00> : vector<16xf32>
    %21 = vector.multi_reduction <add>, %20, %cst_10 [1] : vector<16x128xf32> to vector<16xf32>
    %22 = vector.shape_cast %21 : vector<16xf32> to vector<16x1xf32>
    %cst_11 = arith.constant 1.000000e-16 : f32
    %23 = vector.broadcast %cst_11 : f32 to vector<16x1xf32>
    %24 = arith.maximumf %22, %23 : vector<16x1xf32>
    %25 = math.rsqrt %24 : vector<16x1xf32>
    %26 = arith.mulf %5, %5 : vector<8x128xf32>
    %cst_12 = arith.constant dense<0.000000e+00> : vector<8xf32>
    %27 = vector.multi_reduction <add>, %26, %cst_12 [1] : vector<8x128xf32> to vector<8xf32>
    %28 = vector.shape_cast %27 : vector<8xf32> to vector<8x1xf32>
    %cst_13 = arith.constant 1.000000e-16 : f32
    %29 = vector.broadcast %cst_13 : f32 to vector<8x1xf32>
    %30 = arith.maximumf %28, %29 : vector<8x1xf32>
    %31 = math.rsqrt %30 : vector<8x1xf32>
    %32 = tpu.iota {dimensions = array<i32: 0>} : vector<16x1xi32>
    %33 = vector.broadcast %6 : i32 to vector<16x1xi32>
    %34 = arith.cmpi sge, %32, %33 : vector<16x1xi32>
    %35 = vector.broadcast %7 : i32 to vector<16x1xi32>
    %36 = arith.cmpi slt, %32, %35 : vector<16x1xi32>
    %37 = arith.andi %34, %36 : vector<16x1xi1>
    %cst_14 = arith.constant 0.000000e+00 : f32
    %38 = vector.broadcast %cst_14 : f32 to vector<16x1xf32>
    %39 = arith.select %37, %25, %38 : vector<16x1xi1>, vector<16x1xf32>
    %40 = vector.broadcast %39 : vector<16x1xf32> to vector<16x128xf32>
    %41 = arith.mulf %40, %3 : vector<16x128xf32>
    %cst_15 = arith.constant dense<0.000000e+00> : vector<128xf32>
    %42 = vector.multi_reduction <add>, %41, %cst_15 [0] : vector<16x128xf32> to vector<128xf32>
    %43 = vector.shape_cast %42 : vector<128xf32> to vector<1x128xf32>
    %44 = tpu.iota {dimensions = array<i32: 0>} : vector<8x1xi32>
    %45 = vector.broadcast %8 : i32 to vector<8x1xi32>
    %46 = arith.cmpi sge, %44, %45 : vector<8x1xi32>
    %47 = vector.broadcast %9 : i32 to vector<8x1xi32>
    %48 = arith.cmpi slt, %44, %47 : vector<8x1xi32>
    %49 = arith.andi %46, %48 : vector<8x1xi1>
    %cst_16 = arith.constant 0.000000e+00 : f32
    %50 = vector.broadcast %cst_16 : f32 to vector<8x1xf32>
    %51 = arith.select %49, %19, %50 : vector<8x1xi1>, vector<8x1xf32>
    %52 = vector.broadcast %51 : vector<8x1xf32> to vector<8x128xf32>
    %53 = arith.mulf %52, %1 : vector<8x128xf32>
    %cst_17 = arith.constant dense<0.000000e+00> : vector<128xf32>
    %54 = vector.multi_reduction <add>, %53, %cst_17 [0] : vector<8x128xf32> to vector<128xf32>
    %55 = vector.shape_cast %54 : vector<128xf32> to vector<1x128xf32>
    %56 = arith.subi %7, %6 : i32
    %57 = arith.sitofp %56 : i32 to f32
    %58 = arith.subi %9, %8 : i32
    %59 = arith.sitofp %58 : i32 to f32
    %60 = arith.mulf %43, %55 : vector<1x128xf32>
    %61 = vector.shape_cast %60 : vector<1x128xf32> to vector<1x1x128xf32>
    %cst_18 = arith.constant dense<0.000000e+00> : vector<1xf32>
    %62 = vector.multi_reduction <add>, %61, %cst_18 [1, 2] : vector<1x1x128xf32> to vector<1xf32>
    %63 = vector.shape_cast %62 : vector<1xf32> to vector<1x1x1xf32>
    %64 = vector.extract %63[0, 0, 0] : f32 from vector<1x1x1xf32>
    %65 = arith.mulf %57, %59 : f32
    %66 = arith.divf %64, %65 : f32
    %67 = tpu.iota {dimensions = array<i32: 0>} : vector<8x1xi32>
    %c1_i32 = arith.constant 1 : i32
    %68 = vector.broadcast %c1_i32 : i32 to vector<8x1xi32>
    %69 = arith.cmpi sge, %67, %68 : vector<8x1xi32>
    %c7_i32 = arith.constant 7 : i32
    %70 = vector.broadcast %c7_i32 : i32 to vector<8x1xi32>
    %71 = arith.cmpi slt, %67, %70 : vector<8x1xi32>
    %72 = arith.andi %69, %71 : vector<8x1xi1>
    %cst_19 = arith.constant 0.000000e+00 : f32
    %73 = vector.broadcast %cst_19 : f32 to vector<8x1xf32>
    %74 = arith.select %72, %19, %73 : vector<8x1xi1>, vector<8x1xf32>
    %75 = vector.broadcast %74 : vector<8x1xf32> to vector<8x128xf32>
    %76 = arith.mulf %75, %1 : vector<8x128xf32>
    %cst_20 = arith.constant dense<0.000000e+00> : vector<128xf32>
    %77 = vector.multi_reduction <add>, %76, %cst_20 [0] : vector<8x128xf32> to vector<128xf32>
    %78 = vector.shape_cast %77 : vector<128xf32> to vector<1x128xf32>
    %79 = tpu.iota {dimensions = array<i32: 0>} : vector<8x1xi32>
    %c1_i32_21 = arith.constant 1 : i32
    %80 = vector.broadcast %c1_i32_21 : i32 to vector<8x1xi32>
    %81 = arith.cmpi sge, %79, %80 : vector<8x1xi32>
    %c7_i32_22 = arith.constant 7 : i32
    %82 = vector.broadcast %c7_i32_22 : i32 to vector<8x1xi32>
    %83 = arith.cmpi slt, %79, %82 : vector<8x1xi32>
    %84 = arith.andi %81, %83 : vector<8x1xi1>
    %cst_23 = arith.constant 0.000000e+00 : f32
    %85 = vector.broadcast %cst_23 : f32 to vector<8x1xf32>
    %86 = arith.select %84, %31, %85 : vector<8x1xi1>, vector<8x1xf32>
    %87 = vector.broadcast %86 : vector<8x1xf32> to vector<8x128xf32>
    %88 = arith.mulf %87, %5 : vector<8x128xf32>
    %cst_24 = arith.constant dense<0.000000e+00> : vector<128xf32>
    %89 = vector.multi_reduction <add>, %88, %cst_24 [0] : vector<8x128xf32> to vector<128xf32>
    %90 = vector.shape_cast %89 : vector<128xf32> to vector<1x128xf32>
    %91 = arith.mulf %78, %90 : vector<1x128xf32>
    %92 = vector.shape_cast %91 : vector<1x128xf32> to vector<1x1x128xf32>
    %cst_25 = arith.constant dense<0.000000e+00> : vector<1xf32>
    %93 = vector.multi_reduction <add>, %92, %cst_25 [1, 2] : vector<1x1x128xf32> to vector<1xf32>
    %94 = vector.shape_cast %93 : vector<1xf32> to vector<1x1x1xf32>
    %95 = vector.extract %94[0, 0, 0] : f32 from vector<1x1x1xf32>
    %cst_26 = arith.constant 3.600000e+01 : f32
    %96 = arith.divf %95, %cst_26 : f32
    %97 = arith.truncf %1 : vector<8x128xf32> to vector<8x128xbf16>
    %98 = arith.truncf %3 : vector<16x128xf32> to vector<16x128xbf16>
    %c0_27 = arith.constant 0 : index
    %c0_28 = arith.constant 0 : index
    %99 = vector.load %arg4[%c0_27, %c0_28] : memref<128x128xbf16, #tpu.memory_space<vmem>>, vector<128x128xbf16>
    %cst_29 = arith.constant dense<0.000000e+00> : vector<8x128xf32>
    %100 = tpu.matmul %97, %99, %cst_29 {dimension_numbers = #tpu.dot_dimension_numbers<[1], [0], [0], [1], [0, 0, 1, 1], [], []>} : vector<8x128xbf16>, vector<128x128xbf16>, vector<8x128xf32> -> vector<8x128xf32>
    %c0_30 = arith.constant 0 : index
    %c0_31 = arith.constant 0 : index
    %101 = vector.load %arg5[%c0_30, %c0_31] : memref<1x128xf32, #tpu.memory_space<vmem>>, vector<1x128xf32>
    %102 = vector.broadcast %101 : vector<1x128xf32> to vector<8x128xf32>
    %103 = arith.addf %100, %102 : vector<8x128xf32>
    %c0_32 = arith.constant 0 : index
    %c0_33 = arith.constant 0 : index
    %104 = vector.load %arg6[%c0_32, %c0_33] : memref<128x128xbf16, #tpu.memory_space<vmem>>, vector<128x128xbf16>
    %cst_34 = arith.constant dense<0.000000e+00> : vector<16x128xf32>
    %105 = tpu.matmul %98, %104, %cst_34 {dimension_numbers = #tpu.dot_dimension_numbers<[1], [0], [0], [1], [0, 0, 1, 1], [], []>} : vector<16x128xbf16>, vector<128x128xbf16>, vector<16x128xf32> -> vector<16x128xf32>
    %c0_35 = arith.constant 0 : index
    %c0_36 = arith.constant 0 : index
    %106 = vector.load %arg7[%c0_35, %c0_36] : memref<1x128xf32, #tpu.memory_space<vmem>>, vector<1x128xf32>
    %107 = vector.broadcast %106 : vector<1x128xf32> to vector<16x128xf32>
    %108 = arith.addf %105, %107 : vector<16x128xf32>
    %109 = arith.truncf %108 : vector<16x128xf32> to vector<16x128xbf16>
    %110 = arith.truncf %103 : vector<8x128xf32> to vector<8x128xbf16>
    %cst_37 = arith.constant dense<0.000000e+00> : vector<16x8xf32>
    %111 = tpu.matmul %109, %110, %cst_37 {dimension_numbers = #tpu.dot_dimension_numbers<[1], [1], [0], [0], [0, 0, 1, 0], [], []>} : vector<16x128xbf16>, vector<8x128xbf16>, vector<16x8xf32> -> vector<16x8xf32>
    %cst_38 = arith.constant dense<0xFF800000> : vector<16xf32>
    %112 = vector.multi_reduction <maximumf>, %111, %cst_38 [1] : vector<16x8xf32> to vector<16xf32>
    %113 = vector.shape_cast %112 : vector<16xf32> to vector<16x1xf32>
    %114 = vector.broadcast %113 : vector<16x1xf32> to vector<16x8xf32>
    %115 = arith.subf %111, %114 : vector<16x8xf32>
    %116 = math.exp %115 : vector<16x8xf32>
    %cst_39 = arith.constant dense<0.000000e+00> : vector<16xf32>
    %117 = vector.multi_reduction <add>, %116, %cst_39 [1] : vector<16x8xf32> to vector<16xf32>
    %118 = vector.shape_cast %117 : vector<16xf32> to vector<16x1xf32>
    %119 = tpu.reciprocal %118 : vector<16x1xf32> -> vector<16x1xf32>
    %120 = vector.broadcast %119 : vector<16x1xf32> to vector<16x8xf32>
    %121 = arith.mulf %116, %120 : vector<16x8xf32>
    %122 = arith.truncf %121 : vector<16x8xf32> to vector<16x8xbf16>
    %cst_40 = arith.constant dense<0.000000e+00> : vector<16x128xf32>
    %123 = tpu.matmul %122, %97, %cst_40 {dimension_numbers = #tpu.dot_dimension_numbers<[1], [0], [0], [1], [0, 0, 1, 1], [], []>} : vector<16x8xbf16>, vector<8x128xbf16>, vector<16x128xf32> -> vector<16x128xf32>
    %124 = arith.addf %3, %123 : vector<16x128xf32>
    %c0_41 = arith.constant 0 : index
    %c0_42 = arith.constant 0 : index
    %125 = vector.load %arg8[%c0_41, %c0_42] : memref<2x128xbf16, #tpu.memory_space<vmem>>, vector<2x128xbf16>
    %126 = arith.truncf %124 : vector<16x128xf32> to vector<16x128xbf16>
    %cst_43 = arith.constant dense<0.000000e+00> : vector<2x16xf32>
    %127 = tpu.matmul %125, %126, %cst_43 {dimension_numbers = #tpu.dot_dimension_numbers<[1], [1], [0], [0], [0, 0, 1, 0], [], []>} : vector<2x128xbf16>, vector<16x128xbf16>, vector<2x16xf32> -> vector<2x16xf32>
    %c0_44 = arith.constant 0 : index
    %c0_45 = arith.constant 0 : index
    %128 = vector.load %arg9[%c0_44, %c0_45] : memref<2x1xf32, #tpu.memory_space<vmem>>, vector<2x1xf32>
    %129 = vector.broadcast %128 : vector<2x1xf32> to vector<2x16xf32>
    %130 = arith.addf %127, %129 : vector<2x16xf32>
    %131 = vector.extract_strided_slice %130 {offsets = [0, 0], sizes = [1, 16], strides = [1, 1]} : vector<2x16xf32> to vector<1x16xf32>
    %132 = tpu.iota {dimensions = array<i32: 1>} : vector<1x16xi32>
    %133 = arith.sitofp %132 : vector<1x16xi32> to vector<1x16xf32>
    %cst_46 = arith.constant dense<0xFF800000> : vector<1xf32>
    %134 = vector.multi_reduction <maximumf>, %131, %cst_46 [1] : vector<1x16xf32> to vector<1xf32>
    %135 = vector.shape_cast %134 : vector<1xf32> to vector<1x1xf32>
    %136 = vector.broadcast %135 : vector<1x1xf32> to vector<1x16xf32>
    %137 = arith.cmpf oge, %131, %136 : vector<1x16xf32>
    %cst_47 = arith.constant 1.600000e+01 : f32
    %138 = vector.broadcast %cst_47 : f32 to vector<1x16xf32>
    %139 = arith.select %137, %133, %138 : vector<1x16xi1>, vector<1x16xf32>
    %140 = vector.shape_cast %139 : vector<1x16xf32> to vector<1x1x16xf32>
    %cst_48 = arith.constant dense<0x7F800000> : vector<1xf32>
    %141 = vector.multi_reduction <minimumf>, %140, %cst_48 [1, 2] : vector<1x1x16xf32> to vector<1xf32>
    %142 = vector.shape_cast %141 : vector<1xf32> to vector<1x1x1xf32>
    %143 = vector.extract %142[0, 0, 0] : f32 from vector<1x1x1xf32>
    %144 = vector.extract_strided_slice %130 {offsets = [1, 0], sizes = [1, 16], strides = [1, 1]} : vector<2x16xf32> to vector<1x16xf32>
    %145 = tpu.iota {dimensions = array<i32: 1>} : vector<1x16xi32>
    %146 = arith.sitofp %145 : vector<1x16xi32> to vector<1x16xf32>
    %cst_49 = arith.constant dense<0xFF800000> : vector<1xf32>
    %147 = vector.multi_reduction <maximumf>, %144, %cst_49 [1] : vector<1x16xf32> to vector<1xf32>
    %148 = vector.shape_cast %147 : vector<1xf32> to vector<1x1xf32>
    %149 = vector.broadcast %148 : vector<1x1xf32> to vector<1x16xf32>
    %150 = arith.cmpf oge, %144, %149 : vector<1x16xf32>
    %cst_50 = arith.constant 1.600000e+01 : f32
    %151 = vector.broadcast %cst_50 : f32 to vector<1x16xf32>
    %152 = arith.select %150, %146, %151 : vector<1x16xi1>, vector<1x16xf32>
    %153 = vector.shape_cast %152 : vector<1x16xf32> to vector<1x1x16xf32>
    %cst_51 = arith.constant dense<0x7F800000> : vector<1xf32>
    %154 = vector.multi_reduction <minimumf>, %153, %cst_51 [1, 2] : vector<1x1x16xf32> to vector<1xf32>
    %155 = vector.shape_cast %154 : vector<1xf32> to vector<1x1x1xf32>
    %156 = vector.extract %155[0, 0, 0] : f32 from vector<1x1x1xf32>
    %cst_52 = arith.constant 1.000000e+00 : f32
    %157 = arith.addf %156, %cst_52 : f32
    %158 = arith.subf %157, %143 : f32
    %159 = arith.subf %13, %11 : f32
    %160 = arith.minimumf %157, %13 : f32
    %161 = arith.maximumf %143, %11 : f32
    %162 = arith.subf %160, %161 : f32
    %cst_53 = arith.constant 0.000000e+00 : f32
    %163 = arith.maximumf %cst_53, %162 : f32
    %cst_54 = arith.constant 1.000000e+00 : f32
    %164 = arith.maximumf %158, %cst_54 : f32
    %165 = arith.divf %163, %164 : f32
    %cst_55 = arith.constant 1.000000e+00 : f32
    %166 = arith.maximumf %159, %cst_55 : f32
    %167 = arith.divf %163, %166 : f32
    %168 = arith.addf %165, %167 : f32
    %cst_56 = arith.constant 0.000000e+00 : f32
    %169 = arith.cmpf ogt, %168, %cst_56 : f32
    %cst_57 = arith.constant 2.000000e+00 : f32
    %170 = arith.mulf %cst_57, %165 : f32
    %171 = arith.mulf %170, %167 : f32
    %cst_58 = arith.constant 1.000000e-30 : f32
    %172 = arith.maximumf %168, %cst_58 : f32
    %173 = arith.divf %171, %172 : f32
    %cst_59 = arith.constant 0.000000e+00 : f32
    %174 = arith.select %169, %173, %cst_59 : f32
    %cst_60 = arith.constant 0.000000e+00 : f32
    %175 = arith.cmpf ole, %158, %cst_60 : f32
    %cst_61 = arith.constant 0.000000e+00 : f32
    %176 = arith.cmpf ole, %159, %cst_61 : f32
    %177 = arith.ori %175, %176 : i1
    %cst_62 = arith.constant 0.000000e+00 : f32
    %178 = arith.select %177, %cst_62, %174 : f32
    %cst_63 = arith.constant 1.000000e+00 : f32
    %179 = arith.addf %66, %cst_63 : f32
    %cst_64 = arith.constant 5.000000e-01 : f32
    %180 = arith.mulf %179, %cst_64 : f32
    %181 = arith.addf %180, %178 : f32
    %cst_65 = arith.constant 1.000000e+00 : f32
    %182 = arith.addf %96, %cst_65 : f32
    %cst_66 = arith.constant 5.000000e-01 : f32
    %183 = arith.mulf %182, %cst_66 : f32
    %184 = arith.addf %181, %183 : f32
    %c0_67 = arith.constant 0 : index
    %185 = memref.load %arg10[%c0_67] : memref<1xf32, #tpu.memory_space<smem>>
    memref.store %184, %arg10[%c0_67] : memref<1xf32, #tpu.memory_space<smem>>
    return
  }
}

</mosaic_0001>

<llo_original>
// kernel: tpu_custom_call.1
$region0: #{tpu_custom_call.1}
  #allocation0 [shape = 'u32[]', space=smem, size = 0x4, offset = 0x4, fixed_abs, tag = 'smem constant byte address 0x4 - core index']
  #allocation1 [shape = 'u32[144,128]{1,0:T(1,128)}', space=vmem, size = 0x12000, scoped, tag = 'internal scratch']
  %s0 = inlined_call_operand.vmem [shape: s32[6], index: 0, kind: input, shape index: {}]
  %s1 = inlined_call_operand.hbm [shape: f32[1,8,128], index: 1, kind: input, shape index: {}]
  %s2 = inlined_call_operand.hbm [shape: f32[1,16,128], index: 2, kind: input, shape index: {}]
  %s3 = inlined_call_operand.vmem [shape: f32[1,8,128], index: 3, kind: input, shape index: {}]
  %s4 = inlined_call_operand.hbm [shape: bf16[128,128], index: 4, kind: input, shape index: {}]
  %s5 = inlined_call_operand.vmem [shape: f32[1,128], index: 5, kind: input, shape index: {}]
  %s6 = inlined_call_operand.hbm [shape: bf16[128,128], index: 6, kind: input, shape index: {}]
  %s7 = inlined_call_operand.vmem [shape: f32[1,128], index: 7, kind: input, shape index: {}]
  %s8 = inlined_call_operand.vmem [shape: bf16[2,128], index: 8, kind: input, shape index: {}]
  %s9 = inlined_call_operand.vmem [shape: f32[2,1], index: 9, kind: input, shape index: {}]
  %s10 = inlined_call_operand.hbm [shape: f32[1], index: 10, kind: output, shape index: {}]
  %s11 = sld [smem:[#allocation0]]
  $region70: #{tpu_custom_call.1} parent=0
    _
  %s13 = ssub.s32 1, %s11
  %s14 = scalar_select 0, %s13, %s11
  $region1: #{tpu_custom_call.1} parent=0
    #allocation2 [shape = 'u8[512]{0}', space=smem, size = 0x200, scoped, tag = 'input window, operand 0, single buffered']
    #allocation3 [shape = 's32[1]{0}', space=sflag, size = 0x4, scoped, tag = 'scoped memory for tpu_custom_call.1']
    #allocation4 [shape = 's32[1]{0}', space=sflag, size = 0x4, scoped, tag = 'scoped memory for tpu_custom_call.1']
    #allocation5 [shape = 's32[1]{0}', space=sflag, size = 0x4, scoped, tag = 'scoped memory for tpu_custom_call.1']
    #allocation6 [shape = 'u8[4096]{0}', space=vmem, size = 0x1000, scoped, tag = 'input window, operand 1, single buffered']
    #allocation7 [shape = 'u8[8192]{0}', space=vmem, size = 0x2000, scoped, tag = 'input window, operand 2, single buffered']
    #allocation8 [shape = 's32[1]{0}', space=sflag, size = 0x4, scoped, tag = 'scoped memory for tpu_custom_call.1']
    #allocation9 [shape = 'u8[32768]{0}', space=vmem, size = 0x8000, scoped, tag = 'input window, operand 4, single buffered']
    #allocation10 [shape = 'u8[32768]{0}', space=vmem, size = 0x8000, scoped, tag = 'input window, operand 6, single buffered']
    #allocation11 [shape = 's32[1]{0}', space=sflag, size = 0x4, scoped, tag = 'scoped memory for tpu_custom_call.1']
    #allocation12 [shape = 'u8[512]{0}', space=smem, size = 0x200, scoped, tag = 'output window, operand 0, single buffered']
    %15 = vsyncpa [#allocation5], 0
    %16 = vsyncpa [#allocation3], 0
    %17 = vsyncpa [#allocation8], 0
    %18 = vsyncpa [#allocation11], 0
    %19 = vsyncpa [#allocation4], 0
    // Predicated region
    $region2: #{tpu_custom_call.1} parent=1 // pred_check
      _
    $region3: #{tpu_custom_call.1} parent=1 // pred_check_branch
      %21 = sbr.rel (0) target = $region5
    $region4: #{tpu_custom_call.1} parent=1 // pred_region
      %s23 = ssub.s32 16, 16
      %24 = vsyncadd [#allocation5], %s23
      %s26 = sshll.u32 %s0, 4
      %s27 = int_to_ptr.vmem [resolvable:$true] %s26
      %29 = dma.vmem_to_smem %s27, 16, [#allocation2], [#allocation5]
    $region5: #{tpu_custom_call.1} parent=1 // pred_fallthru
      _
    // Predicated region
    $region6: #{tpu_custom_call.1} parent=1 // pred_check
      _
    $region7: #{tpu_custom_call.1} parent=1 // pred_check_branch
      %31 = sbr.rel (0) target = $region9
    $region8: #{tpu_custom_call.1} parent=1 // pred_region
      %s33 = ssub.s32 128, 128
      %34 = vsyncadd [#allocation3], %s33
      %s36 = sshll.u32 [#allocation6], 4
      %s37 = int_to_ptr.vmem [resolvable:$true] %s36
      %39 = dma.hbm_to_vmem [thread:$0]  %s1, 128, %s37, [#allocation3]
    $region9: #{tpu_custom_call.1} parent=1 // pred_fallthru
      _
    // Predicated region
    $region10: #{tpu_custom_call.1} parent=1 // pred_check
      _
    $region11: #{tpu_custom_call.1} parent=1 // pred_check_branch
      %41 = sbr.rel (0) target = $region13
    $region12: #{tpu_custom_call.1} parent=1 // pred_region
      %s43 = ssub.s32 256, 256
      %44 = vsyncadd [#allocation8], %s43
      %s45 = sshll.u32 [#allocation7], 4
      %s46 = int_to_ptr.vmem [resolvable:$true] %s45
      %51 = dma.hbm_to_vmem [thread:$0]  %s2, 256, %s46, [#allocation8], 128, 128, 8
    $region13: #{tpu_custom_call.1} parent=1 // pred_fallthru
      _
    // Predicated region
    $region14: #{tpu_custom_call.1} parent=1 // pred_check
      _
    $region15: #{tpu_custom_call.1} parent=1 // pred_check_branch
      %53 = sbr.rel (0) target = $region17
    $region16: #{tpu_custom_call.1} parent=1 // pred_region
      _
    $region17: #{tpu_custom_call.1} parent=1 // pred_fallthru
      _
    // Predicated region
    $region18: #{tpu_custom_call.1} parent=1 // pred_check
      _
    $region19: #{tpu_custom_call.1} parent=1 // pred_check_branch
      %55 = sbr.rel (0) target = $region21
    $region20: #{tpu_custom_call.1} parent=1 // pred_region
      %s57 = ssub.s32 1024, 1024
      %58 = vsyncadd [#allocation8], %s57
      %s59 = sshll.u32 [#allocation9], 4
      %s60 = int_to_ptr.vmem [resolvable:$true] %s59
      %65 = dma.hbm_to_vmem [thread:$0]  %s4, 1024, %s60, [#allocation8], 64, 64, 4
    $region21: #{tpu_custom_call.1} parent=1 // pred_fallthru
      _
    // Predicated region
    $region22: #{tpu_custom_call.1} parent=1 // pred_check
      _
    $region23: #{tpu_custom_call.1} parent=1 // pred_check_branch
      %67 = sbr.rel (0) target = $region25
    $region24: #{tpu_custom_call.1} parent=1 // pred_region
      _
    $region25: #{tpu_custom_call.1} parent=1 // pred_fallthru
      _
    // Predicated region
    $region26: #{tpu_custom_call.1} parent=1 // pred_check
      _
    $region27: #{tpu_custom_call.1} parent=1 // pred_check_branch
      %69 = sbr.rel (0) target = $region29
    $region28: #{tpu_custom_call.1} parent=1 // pred_region
      %s71 = ssub.s32 1024, 1024
      %72 = vsyncadd [#allocation11], %s71
      %s73 = sshll.u32 [#allocation10], 4
      %s74 = int_to_ptr.vmem [resolvable:$true] %s73
      %79 = dma.hbm_to_vmem [thread:$0]  %s6, 1024, %s74, [#allocation11], 64, 64, 4
    $region29: #{tpu_custom_call.1} parent=1 // pred_fallthru
      _
    // Predicated region
    $region30: #{tpu_custom_call.1} parent=1 // pred_check
      _
    $region31: #{tpu_custom_call.1} parent=1 // pred_check_branch
      %81 = sbr.rel (0) target = $region33
    $region32: #{tpu_custom_call.1} parent=1 // pred_region
      _
    $region33: #{tpu_custom_call.1} parent=1 // pred_fallthru
      _
    // Predicated region
    $region34: #{tpu_custom_call.1} parent=1 // pred_check
      _
    $region35: #{tpu_custom_call.1} parent=1 // pred_check_branch
      %83 = sbr.rel (0) target = $region37
    $region36: #{tpu_custom_call.1} parent=1 // pred_region
      _
    $region37: #{tpu_custom_call.1} parent=1 // pred_fallthru
      _
    // Predicated region
    $region38: #{tpu_custom_call.1} parent=1 // pred_check
      _
    $region39: #{tpu_custom_call.1} parent=1 // pred_check_branch
      %85 = sbr.rel (0) target = $region41
    $region40: #{tpu_custom_call.1} parent=1 // pred_region
      _
    $region41: #{tpu_custom_call.1} parent=1 // pred_fallthru
      _
    // Predicated region
    $region42: #{tpu_custom_call.1} parent=1 // pred_check
      _
    $region43: #{tpu_custom_call.1} parent=1 // pred_check_branch
      %87 = sbr.rel (0) target = $region45
    $region44: #{tpu_custom_call.1} parent=1 // pred_region
      %88 = dma.done [#allocation5], 16
    $region45: #{tpu_custom_call.1} parent=1 // pred_fallthru
      _
    // Predicated region
    $region46: #{tpu_custom_call.1} parent=1 // pred_check
      _
    $region47: #{tpu_custom_call.1} parent=1 // pred_check_branch
      %90 = sbr.rel (0) target = $region49
    $region48: #{tpu_custom_call.1} parent=1 // pred_region
      %91 = dma.done [#allocation3], 128
    $region49: #{tpu_custom_call.1} parent=1 // pred_fallthru
      _
    // Predicated region
    $region50: #{tpu_custom_call.1} parent=1 // pred_check
      _
    $region51: #{tpu_custom_call.1} parent=1 // pred_check_branch
      %93 = sbr.rel (0) target = $region53
    $region52: #{tpu_custom_call.1} parent=1 // pred_region
      %94 = dma.done [#allocation8], 256
    $region53: #{tpu_custom_call.1} parent=1 // pred_fallthru
      _
    // Predicated region
    $region54: #{tpu_custom_call.1} parent=1 // pred_check
      _
    $region55: #{tpu_custom_call.1} parent=1 // pred_check_branch
      %96 = sbr.rel (0) target = $region57
    $region56: #{tpu_custom_call.1} parent=1 // pred_region
      %97 = dma.done [#allocation8], 1024
    $region57: #{tpu_custom_call.1} parent=1 // pred_fallthru
      _
    // Predicated region
    $region58: #{tpu_custom_call.1} parent=1 // pred_check
      _
    $region59: #{tpu_custom_call.1} parent=1 // pred_check_branch
      %99 = sbr.rel (0) target = $region61
    $region60: #{tpu_custom_call.1} parent=1 // pred_region
      %100 = dma.done [#allocation11], 1024
    $region61: #{tpu_custom_call.1} parent=1 // pred_fallthru
      _
    %101 = sfence
    %v103 = vld [vmem:[#allocation6] sm:$0xff]
    %v104 = vld [vmem:[#allocation7] sm:$0xff]
    %v105 = vld [vmem:[#allocation7 + $0x8] sm:$0xff]
    %v106 = vld [vmem:[%s3] sm:$0xff]
    %s107 = sld [smem:[#allocation2]]
    %s108 = sld [smem:[#allocation2 + $0x1]]
    %s109 = sld [smem:[#allocation2 + $0x2]]
    %s110 = sld [smem:[#allocation2 + $0x3]]
    %s111 = sld [smem:[#allocation2 + $0x4]]
    %s112 = scvt.s32.f32 %s111
    %s113 = sld [smem:[#allocation2 + $0x5]]
    %s114 = scvt.s32.f32 %s113
    %v115 = vmul.f32 %v103, %v103
    %116 = vadd.xlane.f32.xlu0 %v115
    %v117 = vpop.xlane.xlu0 %116
    %v118 = vmax.f32 %v117, 1e-16
    %v119 = vrsqrt.pop %v118
    %v120 = vmul.f32 %v104, %v104
    %v121 = vmul.f32 %v105, %v105
    %122 = vadd.xlane.f32.xlu0 %v120
    %v123 = vpop.xlane.xlu0 %122
    %124 = vadd.xlane.f32.xlu0 %v121
    %v125 = vpop.xlane.xlu0 %124
    %v126 = vmax.f32 %v123, 1e-16
    %v127 = vmax.f32 %v125, 1e-16
    %v128 = vrsqrt.pop %v126
    %v129 = vrsqrt.pop %v127
    %v130 = vmul.f32 %v106, %v106
    %131 = vadd.xlane.f32.xlu0 %v130
    %v132 = vpop.xlane.xlu0 %131
    %v133 = vmax.f32 %v132, 1e-16
    %v134 = vrsqrt.pop %v133
    %v135 = vlaneseq
    %v136 = vshrl.u32 %v135, 7
    %v137 = vadd.s32 %v136, 8
    %v138 = vstv %s107
    %vm139 = vcmp.ge.s32.totalorder %v136, %v138
    %vm140 = vcmp.ge.s32.totalorder %v137, %v138
    %v141 = vstv %s108
    %vm142 = vcmp.lt.s32.totalorder %v136, %v141
    %vm143 = vcmp.lt.s32.totalorder %v137, %v141
    %vm144 = vmand %vm139, %vm142
    %vm145 = vmand %vm140, %vm143
    %v146 = vsel %vm144, %v128, 0.0
    %v147 = vsel %vm145, %v129, 0.0
    %v148 = vmul.f32 %v146, %v104
    %v149 = vmul.f32 %v147, %v105
    %v150 = vadd.f32 %v148, %v149
    %v151 = vrot.slane %v150, 4
    %v152 = vadd.f32 %v150, %v151
    %v153 = vrot.slane %v152, 2
    %v154 = vadd.f32 %v152, %v153
    %v155 = vrot.slane %v154, 1
    %v156 = vadd.f32 %v154, %v155
    %v157 = vstv %s109
    %vm158 = vcmp.ge.s32.totalorder %v136, %v157
    %v159 = vstv %s110
    %vm160 = vcmp.lt.s32.totalorder %v136, %v159
    %vm161 = vmand %vm158, %vm160
    %v162 = vsel %vm161, %v119, 0.0
    %v163 = vmul.f32 %v162, %v103
    %v164 = vrot.slane %v163, 4
    %v165 = vadd.f32 %v163, %v164
    %v166 = vrot.slane %v165, 2
    %v167 = vadd.f32 %v165, %v166
    %v168 = vrot.slane %v167, 1
    %v169 = vadd.f32 %v167, %v168
    %s170 = ssub.s32 %s108, %s107
    %s171 = scvt.s32.f32 %s170
    %s172 = ssub.s32 %s110, %s109
    %s173 = scvt.s32.f32 %s172
    %v174 = vmul.f32 %v156, %v169
    %vm175 = vcmask 1040384
    %v176 = vsel %vm175, %v174, 0.0
    %177 = vadd.xlane.f32.xlu0 %v176
    %v178 = vpop.xlane.xlu0 %177
    %v179 = vrot.slane %v178, 4
    %v180 = vadd.f32 %v178, %v179
    %v181 = vrot.slane %v180, 2
    %v182 = vadd.f32 %v180, %v181
    %v183 = vrot.slane %v182, 1
    %v184 = vadd.f32 %v182, %v183
    %s185 = vtos %v184
    %s186 = smul.f32 %s171, %s173
    %v187 = vstv %s186
    %v188 = vrcp.pop %v187
    %s189 = vtos %v188
    %s190 = smul.f32 %s185, %s189
    %vm191 = vcmp.ge.s32.totalorder %v136, 1
    %vm192 = vcmp.lt.s32.totalorder %v136, 7
    %vm193 = vmand %vm191, %vm192
    %v194 = vsel %vm193, %v119, 0.0
    %v195 = vmul.f32 %v194, %v103
    %v196 = vrot.slane %v195, 4
    %v197 = vadd.f32 %v195, %v196
    %v198 = vrot.slane %v197, 2
    %v199 = vadd.f32 %v197, %v198
    %v200 = vrot.slane %v199, 1
    %v201 = vadd.f32 %v199, %v200
    %v202 = vsel %vm193, %v134, 0.0
    %v203 = vmul.f32 %v202, %v106
    %v204 = vrot.slane %v203, 4
    %v205 = vadd.f32 %v203, %v204
    %v206 = vrot.slane %v205, 2
    %v207 = vadd.f32 %v205, %v206
    %v208 = vrot.slane %v207, 1
    %v209 = vadd.f32 %v207, %v208
    %v210 = vmul.f32 %v201, %v209
    %v211 = vsel %vm175, %v210, 0.0
    %212 = vadd.xlane.f32.xlu0 %v211
    %v213 = vpop.xlane.xlu0 %212
    %v214 = vrot.slane %v213, 4
    %v215 = vadd.f32 %v213, %v214
    %v216 = vrot.slane %v215, 2
    %v217 = vadd.f32 %v215, %v216
    %v218 = vrot.slane %v217, 1
    %v219 = vadd.f32 %v217, %v218
    %s220 = vtos %v219
    %v221 = vrcp.pop 36.0
    %s222 = vtos %v221
    %s223 = smul.f32 %s220, %s222
    %v224 = vpack.c.bf16 %v103, %v103
    %v225 = vpack.c.bf16 %v105, %v104
    %v226 = vld [vmem:[#allocation9] sm:$0xf]
    %v227 = vld [vmem:[#allocation9 + $0x4] sm:$0xf]
    %v228 = vld [vmem:[#allocation9 + $0x8] sm:$0xf]
    %v229 = vld [vmem:[#allocation9 + $0xc] sm:$0xf]
    %v230 = vld [vmem:[#allocation9 + $0x10] sm:$0xf]
    %v231 = vld [vmem:[#allocation9 + $0x14] sm:$0xf]
    %v232 = vld [vmem:[#allocation9 + $0x18] sm:$0xf]
    %v233 = vld [vmem:[#allocation9 + $0x1c] sm:$0xf]
    %v234 = vld [vmem:[#allocation9 + $0x20] sm:$0xf]
    %v235 = vld [vmem:[#allocation9 + $0x24] sm:$0xf]
    %v236 = vld [vmem:[#allocation9 + $0x28] sm:$0xf]
    %v237 = vld [vmem:[#allocation9 + $0x2c] sm:$0xf]
    %v238 = vld [vmem:[#allocation9 + $0x30] sm:$0xf]
    %v239 = vld [vmem:[#allocation9 + $0x34] sm:$0xf]
    %v240 = vld [vmem:[#allocation9 + $0x38] sm:$0xf]
    %v241 = vld [vmem:[#allocation9 + $0x3c] sm:$0xf]
    %v242 = vld [vmem:[%s5] sm:$0x1]
    %v244 = vlaneseq
    %v245 = vshrl.u32 %v244, 7
    %v246 = vsub.s32 0, %v245
    %v247 = vrot.slane %v242, %v246
    %v265 = vunpack.c.l.b16 %v226
    %v266 = vunpack.c.l.b16 %v227
    %v267 = vunpack.c.l.b16 %v228
    %v268 = vunpack.c.l.b16 %v229
    %v269 = vunpack.c.l.b16 %v230
    %v270 = vunpack.c.l.b16 %v231
    %v271 = vunpack.c.l.b16 %v232
    %v272 = vunpack.c.l.b16 %v233
    %v273 = vunpack.c.l.b16 %v234
    %v274 = vunpack.c.l.b16 %v235
    %v275 = vunpack.c.l.b16 %v236
    %v276 = vunpack.c.l.b16 %v237
    %v277 = vunpack.c.l.b16 %v238
    %v278 = vunpack.c.l.b16 %v239
    %v279 = vunpack.c.l.b16 %v240
    %v280 = vunpack.c.l.b16 %v241
    %v281 = vpack.c.b16 %v266, %v265
    %v282 = vpack.c.b16 %v268, %v267
    %v283 = vpack.c.b16 %v270, %v269
    %v284 = vpack.c.b16 %v272, %v271
    %v285 = vpack.c.b16 %v274, %v273
    %v286 = vpack.c.b16 %v276, %v275
    %v287 = vpack.c.b16 %v278, %v277
    %v288 = vpack.c.b16 %v280, %v279
    %297 = vmatprep.subr.bf16.mxu0 0
    %298 = vmatpush1.bf16.msra.mxu0 %v281
    %299 = vmatprep.subr.bf16.mxu0 0
    %300 = vmatpush1.bf16.msra.mxu0 %v282
    %301 = vmatprep.subr.bf16.mxu0 0
    %302 = vmatpush1.bf16.msra.mxu0 %v283
    %303 = vmatprep.subr.bf16.mxu0 0
    %304 = vmatpush1.bf16.msra.mxu0 %v284
    %305 = vmatprep.subr.bf16.mxu0 0
    %306 = vmatpush1.bf16.msra.mxu0 %v285
    %307 = vmatprep.subr.bf16.mxu0 0
    %308 = vmatpush1.bf16.msra.mxu0 %v286
    %309 = vmatprep.subr.bf16.mxu0 0
    %310 = vmatpush1.bf16.msra.mxu0 %v287
    %311 = vmatprep.subr.bf16.mxu0 0
    %312 = vmatpush1.bf16.msra.mxu0 %v288
    %313 = vmatprep.subr.bf16.mxu0 0
    %314 = vmatpush1.bf16.msra.mxu0 0
    %315 = vmatprep.subr.bf16.mxu0 0
    %316 = vmatpush1.bf16.msra.mxu0 0
    %317 = vmatprep.subr.bf16.mxu0 0
    %318 = vmatpush1.bf16.msra.mxu0 0
    %319 = vmatprep.subr.bf16.mxu0 0
    %320 = vmatpush1.bf16.msra.mxu0 0
    %321 = vmatprep.subr.bf16.mxu0 0
    %322 = vmatpush1.bf16.msra.mxu0 0
    %323 = vmatprep.subr.bf16.mxu0 0
    %324 = vmatpush1.bf16.msra.mxu0 0
    %325 = vmatprep.subr.bf16.mxu0 0
    %326 = vmatpush1.bf16.msra.mxu0 0
    %327 = vmatprep.subr.bf16.mxu0 0
    %328 = vmatpush1.bf16.msra.mxu0 0
    %329 = vmatprep.mubr.bf16.mxu0 0
    %330 = vmatmul.mubr.bf16.gmra.mrb[0].mxu0 %v224
    %v331 = vpop.f32.mrb[0].mxu0
    %v332 = vadd.f32 %v247, %v331
    %v333 = vpop.f32.mrb[0].mxu0
    %v334 = vpop.f32.mrb[0].mxu0
    %v335 = vpop.f32.mrb[0].mxu0
    %336 = vdwg.mxu0
    %v337 = vld [vmem:[#allocation10] sm:$0xf]
    %v338 = vld [vmem:[#allocation10 + $0x4] sm:$0xf]
    %v339 = vld [vmem:[#allocation10 + $0x8] sm:$0xf]
    %v340 = vld [vmem:[#allocation10 + $0xc] sm:$0xf]
    %v341 = vld [vmem:[#allocation10 + $0x10] sm:$0xf]
    %v342 = vld [vmem:[#allocation10 + $0x14] sm:$0xf]
    %v343 = vld [vmem:[#allocation10 + $0x18] sm:$0xf]
    %v344 = vld [vmem:[#allocation10 + $0x1c] sm:$0xf]
    %v345 = vld [vmem:[#allocation10 + $0x20] sm:$0xf]
    %v346 = vld [vmem:[#allocation10 + $0x24] sm:$0xf]
    %v347 = vld [vmem:[#allocation10 + $0x28] sm:$0xf]
    %v348 = vld [vmem:[#allocation10 + $0x2c] sm:$0xf]
    %v349 = vld [vmem:[#allocation10 + $0x30] sm:$0xf]
    %v350 = vld [vmem:[#allocation10 + $0x34] sm:$0xf]
    %v351 = vld [vmem:[#allocation10 + $0x38] sm:$0xf]
    %v352 = vld [vmem:[#allocation10 + $0x3c] sm:$0xf]
    %v353 = vld [vmem:[%s7] sm:$0x1]
    %v355 = vlaneseq
    %v356 = vshrl.u32 %v355, 7
    %v357 = vsub.s32 0, %v356
    %v358 = vrot.slane %v353, %v357
    %v376 = vunpack.c.l.b16 %v337
    %v377 = vunpack.c.l.b16 %v338
    %v378 = vunpack.c.l.b16 %v339
    %v379 = vunpack.c.l.b16 %v340
    %v380 = vunpack.c.l.b16 %v341
    %v381 = vunpack.c.l.b16 %v342
    %v382 = vunpack.c.l.b16 %v343
    %v383 = vunpack.c.l.b16 %v344
    %v384 = vunpack.c.l.b16 %v345
    %v385 = vunpack.c.l.b16 %v346
    %v386 = vunpack.c.l.b16 %v347
    %v387 = vunpack.c.l.b16 %v348
    %v388 = vunpack.c.l.b16 %v349
    %v389 = vunpack.c.l.b16 %v350
    %v390 = vunpack.c.l.b16 %v351
    %v391 = vunpack.c.l.b16 %v352
    %v392 = vpack.c.b16 %v377, %v376
    %v393 = vpack.c.b16 %v379, %v378
    %v394 = vpack.c.b16 %v381, %v380
    %v395 = vpack.c.b16 %v383, %v382
    %v396 = vpack.c.b16 %v385, %v384
    %v397 = vpack.c.b16 %v387, %v386
    %v398 = vpack.c.b16 %v389, %v388
    %v399 = vpack.c.b16 %v391, %v390
    %408 = vmatprep.subr.bf16.mxu0 0
    %409 = vmatpush1.bf16.msra.mxu0 %v392
    %410 = vmatprep.subr.bf16.mxu0 0
    %411 = vmatpush1.bf16.msra.mxu0 %v393
    %412 = vmatprep.subr.bf16.mxu0 0
    %413 = vmatpush1.bf16.msra.mxu0 %v394
    %414 = vmatprep.subr.bf16.mxu0 0
    %415 = vmatpush1.bf16.msra.mxu0 %v395
    %416 = vmatprep.subr.bf16.mxu0 0
    %417 = vmatpush1.bf16.msra.mxu0 %v396
    %418 = vmatprep.subr.bf16.mxu0 0
    %419 = vmatpush1.bf16.msra.mxu0 %v397
    %420 = vmatprep.subr.bf16.mxu0 0
    %421 = vmatpush1.bf16.msra.mxu0 %v398
    %422 = vmatprep.subr.bf16.mxu0 0
    %423 = vmatpush1.bf16.msra.mxu0 %v399
    %424 = vmatprep.subr.bf16.mxu0 0
    %425 = vmatpush1.bf16.msra.mxu0 0
    %426 = vmatprep.subr.bf16.mxu0 0
    %427 = vmatpush1.bf16.msra.mxu0 0
    %428 = vmatprep.subr.bf16.mxu0 0
    %429 = vmatpush1.bf16.msra.mxu0 0
    %430 = vmatprep.subr.bf16.mxu0 0
    %431 = vmatpush1.bf16.msra.mxu0 0
    %432 = vmatprep.subr.bf16.mxu0 0
    %433 = vmatpush1.bf16.msra.mxu0 0
    %434 = vmatprep.subr.bf16.mxu0 0
    %435 = vmatpush1.bf16.msra.mxu0 0
    %436 = vmatprep.subr.bf16.mxu0 0
    %437 = vmatpush1.bf16.msra.mxu0 0
    %438 = vmatprep.subr.bf16.mxu0 0
    %439 = vmatpush1.bf16.msra.mxu0 0
    %440 = vmatprep.mubr.bf16.mxu0 0
    %441 = vmatmul.mubr.bf16.gmra.mrb[0].mxu0 %v225
    %v442 = vpop.f32.mrb[0].mxu0
    %v443 = vadd.f32 %v358, %v442
    %v444 = vpop.f32.mrb[0].mxu0
    %v445 = vpop.f32.mrb[0].mxu0
    %v446 = vadd.f32 %v358, %v445
    %v447 = vpop.f32.mrb[0].mxu0
    %448 = vdwg.mxu0
    %v449 = vpack.c.bf16 %v446, %v443
    %v450 = vpack.c.bf16 %v332, %v332
    %451 = vmatprep.subr.bf16.mxu0 0
    %452 = vmatpush1.bf16.xpose.msra.mxu0 %v450
    %453 = vmatprep.subr.bf16.mxu0 0
    %454 = vmatpush1.bf16.xpose.msra.mxu0 0
    %455 = vmatprep.subr.bf16.mxu0 0
    %456 = vmatpush1.bf16.xpose.msra.mxu0 0
    %457 = vmatprep.subr.bf16.mxu0 0
    %458 = vmatpush1.bf16.xpose.msra.mxu0 0
    %459 = vmatprep.subr.bf16.mxu0 0
    %460 = vmatpush1.bf16.xpose.msra.mxu0 0
    %461 = vmatprep.subr.bf16.mxu0 0
    %462 = vmatpush1.bf16.xpose.msra.mxu0 0
    %463 = vmatprep.subr.bf16.mxu0 0
    %464 = vmatpush1.bf16.xpose.msra.mxu0 0
    %465 = vmatprep.subr.bf16.mxu0 0
    %466 = vmatpush1.bf16.xpose.msra.mxu0 0
    %467 = vmatprep.subr.bf16.mxu0 0
    %468 = vmatpush1.bf16.xpose.msra.mxu0 0
    %469 = vmatprep.subr.bf16.mxu0 0
    %470 = vmatpush1.bf16.xpose.msra.mxu0 0
    %471 = vmatprep.subr.bf16.mxu0 0
    %472 = vmatpush1.bf16.xpose.msra.mxu0 0
    %473 = vmatprep.subr.bf16.mxu0 0
    %474 = vmatpush1.bf16.xpose.msra.mxu0 0
    %475 = vmatprep.subr.bf16.mxu0 0
    %476 = vmatpush1.bf16.xpose.msra.mxu0 0
    %477 = vmatprep.subr.bf16.mxu0 0
    %478 = vmatpush1.bf16.xpose.msra.mxu0 0
    %479 = vmatprep.subr.bf16.mxu0 0
    %480 = vmatpush1.bf16.xpose.msra.mxu0 0
    %481 = vmatprep.subr.bf16.mxu0 0
    %482 = vmatpush1.bf16.xpose.msra.mxu0 0
    %483 = vmatprep.mubr.bf16.mxu0 0
    %484 = vmatmul.mubr.bf16.gmra.mrb[0].mxu0 %v449
    %v485 = vpop.f32.mrb[0].mxu0
    %v486 = vadd.f32 0.0, %v485
    %v487 = vpop.f32.mrb[0].mxu0
    %v488 = vpop.f32.mrb[0].mxu0
    %v489 = vadd.f32 0.0, %v488
    %v490 = vpop.f32.mrb[0].mxu0
    %491 = vdwg.mxu0
    %vm492 = vcmask 64512
    %v493 = vsel %vm492, %v486, -inf
    %494 = vmax.xlane.f32.xlu0 %v493
    %v495 = vpop.xlane.xlu0 %494
    %v496 = vsel %vm492, %v489, -inf
    %497 = vmax.xlane.f32.xlu0 %v496
    %v498 = vpop.xlane.xlu0 %497
    %v499 = vsub.f32 %v486, %v495
    %v500 = vsub.f32 %v489, %v498
    %v501 = vmul.f32 %v499, 1.442695
    %v502 = vpow.pop %v501
    %v503 = vmul.f32 %v500, 1.442695
    %v504 = vpow.pop %v503
    %v505 = vsel %vm492, %v502, 0.0
    %506 = vadd.xlane.f32.xlu0 %v505
    %v507 = vpop.xlane.xlu0 %506
    %v508 = vsel %vm492, %v504, 0.0
    %509 = vadd.xlane.f32.xlu0 %v508
    %v510 = vpop.xlane.xlu0 %509
    %v511 = vrcp.pop %v507
    %v512 = vrcp.pop %v510
    %v513 = vmul.f32 %v502, %v511
    %v514 = vmul.f32 %v504, %v512
    %v515 = vpack.c.bf16 %v514, %v513
    %v517 = vsel %vm492, %v515, 0
    %vm519 = vcmask 1043456
    %v521 = vsel %vm519, %v224, 0
    %523 = vmatprep.subr.bf16.mxu0 0
    %524 = vmatpush1.bf16.msra.mxu0 %v521
    %525 = vmatprep.subr.bf16.mxu0 0
    %526 = vmatpush1.bf16.msra.mxu0 0
    %527 = vmatprep.subr.bf16.mxu0 0
    %528 = vmatpush1.bf16.msra.mxu0 0
    %529 = vmatprep.subr.bf16.mxu0 0
    %530 = vmatpush1.bf16.msra.mxu0 0
    %531 = vmatprep.subr.bf16.mxu0 0
    %532 = vmatpush1.bf16.msra.mxu0 0
    %533 = vmatprep.subr.bf16.mxu0 0
    %534 = vmatpush1.bf16.msra.mxu0 0
    %535 = vmatprep.subr.bf16.mxu0 0
    %536 = vmatpush1.bf16.msra.mxu0 0
    %537 = vmatprep.subr.bf16.mxu0 0
    %538 = vmatpush1.bf16.msra.mxu0 0
    %539 = vmatprep.subr.bf16.mxu0 0
    %540 = vmatpush1.bf16.msra.mxu0 0
    %541 = vmatprep.subr.bf16.mxu0 0
    %542 = vmatpush1.bf16.msra.mxu0 0
    %543 = vmatprep.subr.bf16.mxu0 0
    %544 = vmatpush1.bf16.msra.mxu0 0
    %545 = vmatprep.subr.bf16.mxu0 0
    %546 = vmatpush1.bf16.msra.mxu0 0
    %547 = vmatprep.subr.bf16.mxu0 0
    %548 = vmatpush1.bf16.msra.mxu0 0
    %549 = vmatprep.subr.bf16.mxu0 0
    %550 = vmatpush1.bf16.msra.mxu0 0
    %551 = vmatprep.subr.bf16.mxu0 0
    %552 = vmatpush1.bf16.msra.mxu0 0
    %553 = vmatprep.subr.bf16.mxu0 0
    %554 = vmatpush1.bf16.msra.mxu0 0
    %555 = vmatprep.mubr.bf16.mxu0 0
    %556 = vmatmul.mubr.bf16.gmra.mrb[0].mxu0 %v517
    %v557 = vpop.f32.mrb[0].mxu0
    %v558 = vadd.f32 0.0, %v557
    %v559 = vpop.f32.mrb[0].mxu0
    %v560 = vpop.f32.mrb[0].mxu0
    %v561 = vadd.f32 0.0, %v560
    %v562 = vpop.f32.mrb[0].mxu0
    %563 = vdwg.mxu0
    %v564 = vadd.f32 %v104, %v558
    %v565 = vadd.f32 %v105, %v561
    %v566 = vld [vmem:[%s8] sm:$0x1]
    %v567 = vpack.c.bf16 %v565, %v564
    %v568 = vld [vmem:[%s9] sm:$0x3]
    %570 = vset.pattern.permute.xlu0 0
    %571 = vperm.xlu0 %570, %v568
    %v572 = vpop.permute.xlu0 %571
    %574 = vmatprep.subr.bf16.mxu0 0
    %575 = vmatpush1.bf16.xpose.msra.mxu0 %v567
    %576 = vmatprep.subr.bf16.mxu0 0
    %577 = vmatpush1.bf16.xpose.msra.mxu0 0
    %578 = vmatprep.subr.bf16.mxu0 0
    %579 = vmatpush1.bf16.xpose.msra.mxu0 0
    %580 = vmatprep.subr.bf16.mxu0 0
    %581 = vmatpush1.bf16.xpose.msra.mxu0 0
    %582 = vmatprep.subr.bf16.mxu0 0
    %583 = vmatpush1.bf16.xpose.msra.mxu0 0
    %584 = vmatprep.subr.bf16.mxu0 0
    %585 = vmatpush1.bf16.xpose.msra.mxu0 0
    %586 = vmatprep.subr.bf16.mxu0 0
    %587 = vmatpush1.bf16.xpose.msra.mxu0 0
    %588 = vmatprep.subr.bf16.mxu0 0
    %589 = vmatpush1.bf16.xpose.msra.mxu0 0
    %590 = vmatprep.subr.bf16.mxu0 0
    %591 = vmatpush1.bf16.xpose.msra.mxu0 0
    %592 = vmatprep.subr.bf16.mxu0 0
    %593 = vmatpush1.bf16.xpose.msra.mxu0 0
    %594 = vmatprep.subr.bf16.mxu0 0
    %595 = vmatpush1.bf16.xpose.msra.mxu0 0
    %596 = vmatprep.subr.bf16.mxu0 0
    %597 = vmatpush1.bf16.xpose.msra.mxu0 0
    %598 = vmatprep.subr.bf16.mxu0 0
    %599 = vmatpush1.bf16.xpose.msra.mxu0 0
    %600 = vmatprep.subr.bf16.mxu0 0
    %601 = vmatpush1.bf16.xpose.msra.mxu0 0
    %602 = vmatprep.subr.bf16.mxu0 0
    %603 = vmatpush1.bf16.xpose.msra.mxu0 0
    %604 = vmatprep.subr.bf16.mxu0 0
    %605 = vmatpush1.bf16.xpose.msra.mxu0 0
    %606 = vmatprep.mubr.bf16.mxu0 0
    %607 = vmatmul.mubr.bf16.gmra.mrb[0].mxu0 %v566
    %v608 = vpop.f32.mrb[0].mxu0
    %v609 = vadd.f32 %v572, %v608
    %v610 = vpop.f32.mrb[0].mxu0
    %v611 = vpop.f32.mrb[0].mxu0
    %v612 = vpop.f32.mrb[0].mxu0
    %613 = vdwg.mxu0
    %v614 = vlaneseq
    %v615 = vand.u32 %v614, 127
    %v616 = vcvt.s32.f32 %v615
    %vm617 = vcmask 122880
    %v618 = vsel %vm617, %v609, -inf
    %619 = vmax.xlane.f32.xlu0 %v618
    %v620 = vpop.xlane.xlu0 %619
    %vm621 = vcmp.ge.f32.partialorder %v609, %v620
    %v622 = vsel %vm621, %v616, 16.0
    %v623 = vsel %vm617, %v622, inf
    %624 = vmin.xlane.f32.xlu0 %v623
    %v625 = vpop.xlane.xlu0 %624
    %v626 = vrot.slane %v625, 4
    %v627 = vmin.f32 %v625, %v626
    %v628 = vrot.slane %v627, 2
    %v629 = vmin.f32 %v627, %v628
    %v630 = vrot.slane %v629, 1
    %v631 = vmin.f32 %v629, %v630
    %s632 = vtos %v631
    %vm633 = vcmask 123905
    %v634 = vsel %vm633, %v609, -inf
    %635 = vmax.xlane.f32.xlu0 %v634
    %v636 = vpop.xlane.xlu0 %635
    %vm637 = vcmp.ge.f32.partialorder %v609, %v636
    %v638 = vsel %vm637, %v616, 16.0
    %v639 = vsel %vm633, %v638, inf
    %640 = vmin.xlane.f32.xlu0 %v639
    %v641 = vpop.xlane.xlu0 %640
    %v642 = vrot.slane %v641, 4
    %v643 = vmin.f32 %v641, %v642
    %v644 = vrot.slane %v643, 2
    %v645 = vmin.f32 %v643, %v644
    %v646 = vrot.slane %v645, 1
    %v647 = vmin.f32 %v645, %v646
    %s648 = vtos %v647
    %s649 = sadd.f32 %s648, 1.0
    %s650 = ssub.f32 %s649, %s632
    %s651 = ssub.f32 %s114, %s112
    %s652 = smin.f32 %s649, %s114
    %s653 = smax.f32 %s632, %s112
    %s654 = ssub.f32 %s652, %s653
    %s655 = smax.f32 %s654, 0.0
    %s656 = smax.f32 %s650, 1.0
    %v657 = vstv %s656
    %v658 = vrcp.pop %v657
    %s659 = vtos %v658
    %s660 = smul.f32 %s655, %s659
    %s661 = smax.f32 %s651, 1.0
    %v662 = vstv %s661
    %v663 = vrcp.pop %v662
    %s664 = vtos %v663
    %s665 = smul.f32 %s655, %s664
    %s666 = sadd.f32 %s660, %s665
    %p667 = scmp.gt.f32.partialorder %s666, 0.0
    %s668 = smul.f32 %s660, 2.0
    %s669 = smul.f32 %s668, %s665
    %s670 = smax.f32 %s666, 1e-30
    %v671 = vstv %s670
    %v672 = vrcp.pop %v671
    %s673 = vtos %v672
    %s674 = smul.f32 %s669, %s673
    %s675 = scalar_select %p667, %s674, 0.0
    %p676 = scmp.le.f32.partialorder %s650, 0.0
    %p677 = scmp.le.f32.partialorder %s651, 0.0
    %p678 = por %p676, %p677
    %s679 = scalar_select %p678, 0.0, %s675
    %s680 = sadd.f32 %s190, 1.0
    %s681 = smul.f32 %s680, 0.5
    %s682 = sadd.f32 %s681, %s679
    %s683 = sadd.f32 %s223, 1.0
    %s684 = smul.f32 %s683, 0.5
    %s685 = sadd.f32 %s682, %s684
    %s686 = scalar_lea.smem [#allocation12], 0
    %687 = sst [smem:[%s686]] %s685
    // Predicated region
    $region62: #{tpu_custom_call.1} parent=1 // pred_check
      _
    $region63: #{tpu_custom_call.1} parent=1 // pred_check_branch
      %689 = sbr.rel (0) target = $region65
    $region64: #{tpu_custom_call.1} parent=1 // pred_region
      %s691 = ssub.s32 16, 16
      %692 = vsyncadd [#allocation4], %s691
      %695 = dma.smem_to_hbm [#allocation12], 16, %s10, [#allocation4]
    $region65: #{tpu_custom_call.1} parent=1 // pred_fallthru
      _
    // Predicated region
    $region66: #{tpu_custom_call.1} parent=1 // pred_check
      _
    $region67: #{tpu_custom_call.1} parent=1 // pred_check_branch
      %697 = sbr.rel (0) target = $region69
    $region68: #{tpu_custom_call.1} parent=1 // pred_region
      %698 = dma.done [#allocation4], 16
    $region69: #{tpu_custom_call.1} parent=1 // pred_fallthru
      _
    %699 = sfence
    %700 = vsyncpa [#allocation3], 1
    %701 = vsyncpa [#allocation8], 1
    %702 = vsyncpa [#allocation11], 1
    %703 = vsyncpa [#allocation4], 1
    %704 = vsyncpa [#allocation5], 1

</llo_original>
